<compile_context>
chip_gen: v7x
topology: tpu7x:2x2x1
jax: 0.10.0
libtpu: 0.0.40
codegen_flags: <defaults>
</compile_context>

<pallas_src>
import functools

import jax
import jax.numpy as jnp
from jax.experimental import pallas as pl
from jax.experimental.pallas import tpu as pltpu


LANE = 128
SUBLANE = 8
R_TILE_MAX = 2048           # 2048 rows * 128 lanes = 256K boxes/tile (~4 MiB/input tile)
R_SPLIT_MIN = 64            # below 64 rows (8K boxes) one tile beats splitting for v7x
VMEM_LIMIT_BYTES = 32 * 1024 * 1024


def _round_up(x, m):
    return ((x + m - 1) // m) * m


# --------------------------------------------------------------------------- #
# Kernel bodies
# --------------------------------------------------------------------------- #
def _box_loss(pred_ref, target_ref, eps):
    """Unmasked per-box -log(IoU), shape (r_tile, LANE) f32."""
    px1, py1, px2, py2 = pred_ref[0], pred_ref[1], pred_ref[2], pred_ref[3]
    tx1, ty1, tx2, ty2 = target_ref[0], target_ref[1], target_ref[2], target_ref[3]

    # Aligned bbox_overlaps (det3d / mmdet-v1 "+1" convention).
    lt_x = jnp.maximum(px1, tx1)
    lt_y = jnp.maximum(py1, ty1)
    rb_x = jnp.minimum(px2, tx2)
    rb_y = jnp.minimum(py2, ty2)

    w = jnp.maximum(rb_x - lt_x + 1.0, 0.0)
    h = jnp.maximum(rb_y - lt_y + 1.0, 0.0)
    overlap = w * h

    area_p = (px2 - px1 + 1.0) * (py2 - py1 + 1.0)
    area_t = (tx2 - tx1 + 1.0) * (ty2 - ty1 + 1.0)
    union = area_p + area_t - overlap

    # Exact divide: kernel is HBM-bound, the extra VALU/EUP work is hidden slack
    # and it keeps bit-parity with the torch reference.
    ious = jnp.maximum(overlap / union, eps)     # .clamp(min=eps)
    return -jnp.log(ious)                        # -ious.log()


def _valid_mask(n_local, r_tile):
    """Mask of boxes with in-tile flat index < n_local (boundary/tail tiles only)."""
    row = jax.lax.broadcasted_iota(jnp.int32, (r_tile, LANE), 0)
    lane = jax.lax.broadcasted_iota(jnp.int32, (r_tile, LANE), 1)
    return (row * LANE + lane) < n_local


def _iou_loss_reduce_kernel(n_ref, pred_ref, target_ref, *rest, eps, r_tile,
                            has_weight):
    """Per-tile partial sum of (optionally weighted) -log(IoU).

    n_ref      : SMEM (1,) int32          -- number of valid boxes (scalar prefetch)
    pred_ref   : (4, r_tile, 128) f32     -- rows = (x1, y1, x2, y2)
    target_ref : (4, r_tile, 128) f32
    weight_ref : (r_tile, 128) f32        -- only when has_weight
    out_ref    : (1, 1, 128) f32          -- per-tile lane-wise partial sums
    """
    if has_weight:
        weight_ref, out_ref = rest
    else:
        (out_ref,) = rest

    loss = _box_loss(pred_ref, target_ref, eps)
    if has_weight:
        loss = loss * weight_ref[...]

    boxes_per_tile = r_tile * LANE
    n_local = n_ref[0] - pl.program_id(0) * boxes_per_tile

    # Interior (fully valid) tiles skip the iota/compare/select entirely.
    @pl.when(n_local >= boxes_per_tile)
    def _():
        out_ref[...] = jnp.sum(loss, axis=0).reshape(1, 1, LANE)

    # Only the tile containing the n boundary (and padded tail tiles) pays for
    # the mask; padded lanes (0/0 -> NaN) are removed by the select.
    @pl.when(n_local < boxes_per_tile)
    def _():
        masked = jnp.where(_valid_mask(n_local, r_tile), loss, 0.0)
        out_ref[...] = jnp.sum(masked, axis=0).reshape(1, 1, LANE)


def _iou_loss_perbox_kernel(n_ref, pred_ref, target_ref, loss_ref, *, eps, r_tile):
    """Per-box -log(IoU) (for reduction='none'); padded lanes are zeroed."""
    loss = _box_loss(pred_ref, target_ref, eps)

    boxes_per_tile = r_tile * LANE
    n_local = n_ref[0] - pl.program_id(0) * boxes_per_tile

    @pl.when(n_local >= boxes_per_tile)
    def _():
        loss_ref[...] = loss

    @pl.when(n_local < boxes_per_tile)
    def _():
        loss_ref[...] = jnp.where(_valid_mask(n_local, r_tile), loss, 0.0)


# --------------------------------------------------------------------------- #
# Wrapper glue
# --------------------------------------------------------------------------- #
def _box_count(boxes):
    if boxes.ndim == 2 and boxes.shape[0] == 4 and boxes.shape[1] != 4:
        return boxes.shape[1]       # coordinate-major (4, n)
    return boxes.shape[0]           # box-major (n, 4)


def _pack_boxes(boxes, npad):
    """Pack boxes into coordinate-major (4, npad//128, 128) f32 planes.

    Accepts box-major (n, 4) or coordinate-major (4, n).  For the box-major
    case, cast + transpose + pad (on the lane axis, after the transpose) +
    reshape are kept adjacent so XLA fuses them into one copy pass.  Feeding
    coordinate-major boxes avoids the relayout entirely.
    """
    b = boxes.astype(jnp.float32)
    if not (b.ndim == 2 and b.shape[0] == 4 and b.shape[1] != 4):
        b = b.T                                         # (4, n)
    n = b.shape[1]
    b = jnp.pad(b, ((0, 0), (0, npad - n)))
    return b.reshape(4, npad // LANE, LANE)


def _choose_tiling(n):
    """Pick (rows_per_tile, num_tiles) for n boxes packed 128 per row."""
    r_needed = _round_up(max(pl.cdiv(max(n, 1), LANE), 1), SUBLANE)
    if r_needed <= R_SPLIT_MIN:
        return r_needed, 1
    if r_needed <= 2 * R_TILE_MAX:
        # Two tiles so both v7x TensorCores get work; harmless on v5e/v6e.
        return _round_up(pl.cdiv(r_needed, 2), SUBLANE), 2
    return R_TILE_MAX, pl.cdiv(r_needed, R_TILE_MAX)


def _box_spec(r_tile):
    return pl.BlockSpec((4, r_tile, LANE), lambda i, n_s: (0, i, 0))


def _compiler_params():
    return pltpu.CompilerParams(
        dimension_semantics=("parallel",),
        vmem_limit_bytes=VMEM_LIMIT_BYTES,
    )


def iou_loss_sum(pred, target, weight=None, eps=1e-6):
    """Sum over boxes of (optionally weighted) -log(IoU). Returns scalar f32."""
    n = _box_count(pred)
    r_tile, num_tiles = _choose_tiling(n)
    npad = r_tile * num_tiles * LANE

    n_arr = jnp.array([n], dtype=jnp.int32)            # scalar-prefetch arg (SMEM)
    inputs = [_pack_boxes(pred, npad), _pack_boxes(target, npad)]
    in_specs = [_box_spec(r_tile), _box_spec(r_tile)]

    has_weight = weight is not None
    if has_weight:
        w = jnp.pad(weight.astype(jnp.float32).reshape(-1), (0, npad - n))
        inputs.append(w.reshape(npad // LANE, LANE))
        in_specs.append(pl.BlockSpec((r_tile, LANE), lambda i, n_s: (i, 0)))

    partials = pl.pallas_call(
        functools.partial(_iou_loss_reduce_kernel, eps=eps, r_tile=r_tile,
                          has_weight=has_weight),
        out_shape=jax.ShapeDtypeStruct((num_tiles, 1, LANE), jnp.float32),
        grid_spec=pltpu.PrefetchScalarGridSpec(
            num_scalar_prefetch=1,
            grid=(num_tiles,),
            in_specs=in_specs,
            out_specs=pl.BlockSpec((1, 1, LANE), lambda i, n_s: (i, 0, 0)),
        ),
        compiler_params=_compiler_params(),
    )(n_arr, *inputs)

    return jnp.sum(partials)                            # tiny (num_tiles*128,) reduce


def iou_loss_per_box(pred, target, eps=1e-6):
    """Per-box unweighted -log(IoU), shape (n,) f32 (for reduction='none')."""
    n = _box_count(pred)
    r_tile, num_tiles = _choose_tiling(n)
    r_total = r_tile * num_tiles
    npad = r_total * LANE

    n_arr = jnp.array([n], dtype=jnp.int32)
    loss_packed = pl.pallas_call(
        functools.partial(_iou_loss_perbox_kernel, eps=eps, r_tile=r_tile),
        out_shape=jax.ShapeDtypeStruct((r_total, LANE), jnp.float32),
        grid_spec=pltpu.PrefetchScalarGridSpec(
            num_scalar_prefetch=1,
            grid=(num_tiles,),
            in_specs=[_box_spec(r_tile), _box_spec(r_tile)],
            out_specs=pl.BlockSpec((r_tile, LANE), lambda i, n_s: (i, 0)),
        ),
        compiler_params=_compiler_params(),
    )(n_arr, _pack_boxes(pred, npad), _pack_boxes(target, npad))

    return loss_packed.reshape(npad)[:n]


class IoULoss:
    """JAX/Pallas port of det3d IoULoss (forward only)."""

    def __init__(self, eps=1e-6, reduction="mean", loss_weight=1.0):
        self.eps = eps
        self.reduction = reduction
        self.loss_weight = loss_weight

    def __call__(self, pred, target, weight=None, avg_factor=None,
                 reduction_override=None):
        assert reduction_override in (None, "none", "mean", "sum")
        reduction = reduction_override if reduction_override else self.reduction
        n = _box_count(pred)

        if reduction == "none":
            per_box = iou_loss_per_box(pred, target, eps=self.eps)
            if weight is not None:
                per_box = per_box * weight.astype(jnp.float32)
            # TODO(synk): torch's data-dependent early return for all-zero weight
            # ((pred*weight).sum()) is not folded into the 'none' path.
            return self.loss_weight * per_box

        # 'mean'/'sum': weight multiply and per-box reduction fused in the kernel.
        total = iou_loss_sum(pred, target, weight=weight, eps=self.eps)
        if avg_factor is None:
            loss = total / n if reduction == "mean" else total
        else:
            if reduction != "mean":
                raise ValueError("avg_factor can only be used with reduction='mean'")
            loss = total / avg_factor
        loss = self.loss_weight * loss

        if weight is not None:
            # torch: if weight is not None and not torch.any(weight > 0):
            #            return (pred * weight).sum()
            w = weight.astype(jnp.float32)
            p = pred.astype(jnp.float32)
            fallback = (p * (w[:, None] if w.ndim == 1 else w)).sum()
            loss = jnp.where(jnp.any(w > 0), loss, fallback)
        return loss


# --------------------------------------------------------------------------- #
# Pure-JAX reference (det3d semantics) for correctness checks
# --------------------------------------------------------------------------- #
def _reference_per_box(pred, target, eps=1e-6):
    lt = jnp.maximum(pred[:, :2], target[:, :2])
    rb = jnp.minimum(pred[:, 2:], target[:, 2:])
    wh = jnp.clip(rb - lt + 1.0, 0.0)
    overlap = wh[:, 0] * wh[:, 1]
    a1 = (pred[:, 2] - pred[:, 0] + 1.0) * (pred[:, 3] - pred[:, 1] + 1.0)
    a2 = (target[:, 2] - target[:, 0] + 1.0) * (target[:, 3] - target[:, 1] + 1.0)
    ious = jnp.maximum(overlap / (a1 + a2 - overlap), eps)
    return -jnp.log(ious)


if __name__ == "__main__":
    key = jax.random.PRNGKey(0)

    def make_boxes(k, n):
        k1, k2, k3 = jax.random.split(k, 3)
        xy = jax.random.uniform(k1, (n, 2), jnp.float32, 0.0, 10.0)
        wh = jax.random.uniform(k2, (n, 2), jnp.float32, 2.0, 12.0)
        pred = jnp.concatenate([xy, xy + wh], axis=1)                 # (n, 4)
        jitter = jax.random.uniform(k3, (n, 4), jnp.float32, -1.0, 1.0)
        return pred, pred + jitter

    k_a, k_b, k_w = jax.random.split(key, 3)

    # Case 1: small n, reduction='mean', no weight (boundary-tile mask path).
    pred_a, target_a = make_boxes(k_a, 8)
    loss_mean = jax.block_until_ready(
        IoULoss(eps=1e-6, reduction="mean", loss_weight=1.0)(pred_a, target_a))
    ref_mean = float(jnp.mean(_reference_per_box(pred_a, target_a)))
    assert loss_mean.shape == ()
    assert abs(float(loss_mean) - ref_mean) < 1e-5, (float(loss_mean), ref_mean)

    # Case 2: reduction='none' (per-box kernel output).
    per_box = jax.block_until_ready(IoULoss(reduction="none")(pred_a, target_a))
    ref_pb = _reference_per_box(pred_a, target_a)
    assert per_box.shape == (8,)
    assert float(jnp.max(jnp.abs(per_box - ref_pb))) < 1e-5

    # Case 3: weighted 'sum' on an exactly tile-filling n=1024
    # (exercises the fully-valid fast path + the in-kernel weight stream).
    pred_b, target_b = make_boxes(k_b, 1024)
    w = jax.random.uniform(k_w, (1024,), jnp.float32, 0.0, 2.0)
    loss_sum = jax.block_until_ready(
        IoULoss(reduction="sum")(pred_b, target_b, weight=w))
    ref_sum = float(jnp.sum(_reference_per_box(pred_b, target_b) * w))
    assert abs(float(loss_sum) - ref_sum) <= 1e-4 * max(1.0, abs(ref_sum)), (
        float(loss_sum), ref_sum)

    print("KERNEL_OK")
</pallas_src>

<mosaic_0001>
module attributes {stable_mosaic.version = 11 : i64} {
  func.func @_iou_loss_reduce_kernel(%arg0: i32, %arg1: memref<1xi32, #tpu.memory_space<smem>>, %arg2: memref<4x8x128xf32, #tpu.memory_space<vmem>>, %arg3: memref<4x8x128xf32, #tpu.memory_space<vmem>>, %arg4: memref<1x1x128xf32, #tpu.memory_space<vmem>>) attributes {dimension_semantics = [#tpu.dimension_semantics<parallel>], iteration_bounds = array<i64: 1>, scalar_prefetch = 1 : i64, scratch_operands = 0 : i64, tpu.core_type = #tpu.core_type<tc>, window_params = [{transform_indices = @transform_0, window_bounds = array<i64: 4, 8, 128>}, {transform_indices = @transform_1, window_bounds = array<i64: 4, 8, 128>}, {transform_indices = @transform_2, window_bounds = array<i64: 1, 1, 128>}]} {
    %c0 = arith.constant 0 : index
    %c0_0 = arith.constant 0 : index
    %c0_1 = arith.constant 0 : index
    %0 = vector.load %arg2[%c0, %c0_0, %c0_1] : memref<4x8x128xf32, #tpu.memory_space<vmem>>, vector<1x8x128xf32>
    %1 = vector.shape_cast %0 : vector<1x8x128xf32> to vector<8x128xf32>
    %c1 = arith.constant 1 : index
    %c0_2 = arith.constant 0 : index
    %c0_3 = arith.constant 0 : index
    %2 = vector.load %arg2[%c1, %c0_2, %c0_3] : memref<4x8x128xf32, #tpu.memory_space<vmem>>, vector<1x8x128xf32>
    %3 = vector.shape_cast %2 : vector<1x8x128xf32> to vector<8x128xf32>
    %c2 = arith.constant 2 : index
    %c0_4 = arith.constant 0 : index
    %c0_5 = arith.constant 0 : index
    %4 = vector.load %arg2[%c2, %c0_4, %c0_5] : memref<4x8x128xf32, #tpu.memory_space<vmem>>, vector<1x8x128xf32>
    %5 = vector.shape_cast %4 : vector<1x8x128xf32> to vector<8x128xf32>
    %c3 = arith.constant 3 : index
    %c0_6 = arith.constant 0 : index
    %c0_7 = arith.constant 0 : index
    %6 = vector.load %arg2[%c3, %c0_6, %c0_7] : memref<4x8x128xf32, #tpu.memory_space<vmem>>, vector<1x8x128xf32>
    %7 = vector.shape_cast %6 : vector<1x8x128xf32> to vector<8x128xf32>
    %c0_8 = arith.constant 0 : index
    %c0_9 = arith.constant 0 : index
    %c0_10 = arith.constant 0 : index
    %8 = vector.load %arg3[%c0_8, %c0_9, %c0_10] : memref<4x8x128xf32, #tpu.memory_space<vmem>>, vector<1x8x128xf32>
    %9 = vector.shape_cast %8 : vector<1x8x128xf32> to vector<8x128xf32>
    %c1_11 = arith.constant 1 : index
    %c0_12 = arith.constant 0 : index
    %c0_13 = arith.constant 0 : index
    %10 = vector.load %arg3[%c1_11, %c0_12, %c0_13] : memref<4x8x128xf32, #tpu.memory_space<vmem>>, vector<1x8x128xf32>
    %11 = vector.shape_cast %10 : vector<1x8x128xf32> to vector<8x128xf32>
    %c2_14 = arith.constant 2 : index
    %c0_15 = arith.constant 0 : index
    %c0_16 = arith.constant 0 : index
    %12 = vector.load %arg3[%c2_14, %c0_15, %c0_16] : memref<4x8x128xf32, #tpu.memory_space<vmem>>, vector<1x8x128xf32>
    %13 = vector.shape_cast %12 : vector<1x8x128xf32> to vector<8x128xf32>
    %c3_17 = arith.constant 3 : index
    %c0_18 = arith.constant 0 : index
    %c0_19 = arith.constant 0 : index
    %14 = vector.load %arg3[%c3_17, %c0_18, %c0_19] : memref<4x8x128xf32, #tpu.memory_space<vmem>>, vector<1x8x128xf32>
    %15 = vector.shape_cast %14 : vector<1x8x128xf32> to vector<8x128xf32>
    %16 = arith.maximumf %1, %9 : vector<8x128xf32>
    %17 = arith.maximumf %3, %11 : vector<8x128xf32>
    %18 = arith.minimumf %5, %13 : vector<8x128xf32>
    %19 = arith.minimumf %7, %15 : vector<8x128xf32>
    %20 = arith.subf %18, %16 : vector<8x128xf32>
    %cst = arith.constant 1.000000e+00 : f32
    %21 = vector.broadcast %cst : f32 to vector<8x128xf32>
    %22 = arith.addf %20, %21 : vector<8x128xf32>
    %cst_20 = arith.constant 0.000000e+00 : f32
    %23 = vector.broadcast %cst_20 : f32 to vector<8x128xf32>
    %24 = arith.maximumf %22, %23 : vector<8x128xf32>
    %25 = arith.subf %19, %17 : vector<8x128xf32>
    %cst_21 = arith.constant 1.000000e+00 : f32
    %26 = vector.broadcast %cst_21 : f32 to vector<8x128xf32>
    %27 = arith.addf %25, %26 : vector<8x128xf32>
    %cst_22 = arith.constant 0.000000e+00 : f32
    %28 = vector.broadcast %cst_22 : f32 to vector<8x128xf32>
    %29 = arith.maximumf %27, %28 : vector<8x128xf32>
    %30 = arith.mulf %24, %29 : vector<8x128xf32>
    %31 = arith.subf %5, %1 : vector<8x128xf32>
    %cst_23 = arith.constant 1.000000e+00 : f32
    %32 = vector.broadcast %cst_23 : f32 to vector<8x128xf32>
    %33 = arith.addf %31, %32 : vector<8x128xf32>
    %34 = arith.subf %7, %3 : vector<8x128xf32>
    %cst_24 = arith.constant 1.000000e+00 : f32
    %35 = vector.broadcast %cst_24 : f32 to vector<8x128xf32>
    %36 = arith.addf %34, %35 : vector<8x128xf32>
    %37 = arith.mulf %33, %36 : vector<8x128xf32>
    %38 = arith.subf %13, %9 : vector<8x128xf32>
    %cst_25 = arith.constant 1.000000e+00 : f32
    %39 = vector.broadcast %cst_25 : f32 to vector<8x128xf32>
    %40 = arith.addf %38, %39 : vector<8x128xf32>
    %41 = arith.subf %15, %11 : vector<8x128xf32>
    %cst_26 = arith.constant 1.000000e+00 : f32
    %42 = vector.broadcast %cst_26 : f32 to vector<8x128xf32>
    %43 = arith.addf %41, %42 : vector<8x128xf32>
    %44 = arith.mulf %40, %43 : vector<8x128xf32>
    %45 = arith.addf %37, %44 : vector<8x128xf32>
    %46 = arith.subf %45, %30 : vector<8x128xf32>
    %47 = arith.divf %30, %46 : vector<8x128xf32>
    %cst_27 = arith.constant 9.99999997E-7 : f32
    %48 = vector.broadcast %cst_27 : f32 to vector<8x128xf32>
    %49 = arith.maximumf %47, %48 : vector<8x128xf32>
    %50 = math.log %49 : vector<8x128xf32>
    %cst_28 = arith.constant 0.000000e+00 : f32
    %51 = vector.broadcast %cst_28 : f32 to vector<8x128xf32>
    %52 = arith.subf %51, %50 : vector<8x128xf32>
    %c0_29 = arith.constant 0 : index
    %53 = memref.load %arg1[%c0_29] : memref<1xi32, #tpu.memory_space<smem>>
    %c1024_i32 = arith.constant 1024 : i32
    %54 = arith.muli %arg0, %c1024_i32 : i32
    %55 = arith.subi %53, %54 : i32
    %c1024_i32_30 = arith.constant 1024 : i32
    %56 = arith.cmpi sge, %55, %c1024_i32_30 : i32
    %57 = arith.extui %56 : i1 to i32
    %c0_i32 = arith.constant 0 : i32
    %58 = arith.cmpi ne, %57, %c0_i32 : i32
    scf.if %58 {
      %cst_33 = arith.constant dense<0.000000e+00> : vector<128xf32>
      %62 = vector.multi_reduction <add>, %52, %cst_33 [0] : vector<8x128xf32> to vector<128xf32>
      %63 = vector.shape_cast %62 : vector<128xf32> to vector<1x1x128xf32>
      %c0_34 = arith.constant 0 : index
      %c0_35 = arith.constant 0 : index
      %c0_36 = arith.constant 0 : index
      %64 = vector.load %arg4[%c0_34, %c0_35, %c0_36] : memref<1x1x128xf32, #tpu.memory_space<vmem>>, vector<1x1x128xf32>
      tpu.vector_store %arg4[%c0_34, %c0_35, %c0_36], %63 {strides = array<i32>} : memref<1x1x128xf32, #tpu.memory_space<vmem>>, vector<1x1x128xf32>,
    } else {
    }
    %c1024_i32_31 = arith.constant 1024 : i32
    %59 = arith.cmpi slt, %55, %c1024_i32_31 : i32
    %60 = arith.extui %59 : i1 to i32
    %c0_i32_32 = arith.constant 0 : i32
    %61 = arith.cmpi ne, %60, %c0_i32_32 : i32
    scf.if %61 {
      %62 = tpu.iota {dimensions = array<i32: 0>} : vector<8x128xi32>
      %63 = tpu.iota {dimensions = array<i32: 1>} : vector<8x128xi32>
      %c128_i32 = arith.constant 128 : i32
      %64 = vector.broadcast %c128_i32 : i32 to vector<8x128xi32>
      %65 = arith.muli %62, %64 : vector<8x128xi32>
      %66 = arith.addi %65, %63 : vector<8x128xi32>
      %67 = vector.broadcast %55 : i32 to vector<8x128xi32>
      %68 = arith.cmpi slt, %66, %67 : vector<8x128xi32>
      %cst_33 = arith.constant 0.000000e+00 : f32
      %69 = vector.broadcast %cst_33 : f32 to vector<8x128xf32>
      %70 = arith.select %68, %52, %69 : vector<8x128xi1>, vector<8x128xf32>
      %cst_34 = arith.constant dense<0.000000e+00> : vector<128xf32>
      %71 = vector.multi_reduction <add>, %70, %cst_34 [0] : vector<8x128xf32> to vector<128xf32>
      %72 = vector.shape_cast %71 : vector<128xf32> to vector<1x1x128xf32>
      %c0_35 = arith.constant 0 : index
      %c0_36 = arith.constant 0 : index
      %c0_37 = arith.constant 0 : index
      %73 = vector.load %arg4[%c0_35, %c0_36, %c0_37] : memref<1x1x128xf32, #tpu.memory_space<vmem>>, vector<1x1x128xf32>
      tpu.vector_store %arg4[%c0_35, %c0_36, %c0_37], %72 {strides = array<i32>} : memref<1x1x128xf32, #tpu.memory_space<vmem>>, vector<1x1x128xf32>,
    } else {
    }
    return
  }
  func.func @transform_0(%arg0: i32, %arg1: memref<1xi32, #tpu.memory_space<smem>>) -> (i32, i32, i32) {
    %c0_i32 = arith.constant 0 : i32
    %c0_i32_0 = arith.constant 0 : i32
    %c0_i32_1 = arith.constant 0 : i32
    return %c0_i32, %arg0, %c0_i32_0 : i32, i32, i32
  }
  func.func @transform_1(%arg0: i32, %arg1: memref<1xi32, #tpu.memory_space<smem>>) -> (i32, i32, i32) {
    %c0_i32 = arith.constant 0 : i32
    %c0_i32_0 = arith.constant 0 : i32
    %c0_i32_1 = arith.constant 0 : i32
    return %c0_i32, %arg0, %c0_i32_0 : i32, i32, i32
  }
  func.func @transform_2(%arg0: i32, %arg1: memref<1xi32, #tpu.memory_space<smem>>) -> (i32, i32, i32) {
    %c0_i32 = arith.constant 0 : i32
    %c0_i32_0 = arith.constant 0 : i32
    %c0_i32_1 = arith.constant 0 : i32
    return %arg0, %c0_i32, %c0_i32_0 : i32, i32, i32
  }
}

</mosaic_0001>

<llo_original>
// kernel: tpu_custom_call.1
$region0: #{tpu_custom_call.1}
  #allocation0 [shape = 'u32[]', space=smem, size = 0x4, offset = 0x4, fixed_abs, tag = 'smem constant byte address 0x4 - core index']
  #allocation1 [shape = 'u32[144,128]{1,0:T(1,128)}', space=vmem, size = 0x12000, scoped, tag = 'internal scratch']
  #allocation2 [shape = 's32[1]{0}', space=sflag, size = 0x4, scoped, tag = 'scoped memory for tpu_custom_call.1']
  #allocation3 [shape = 's32[1]{0:T(128)S(6)}', space=smem, size = 0x200, scoped, tag = 'prefetched SMEM operand 0']
  %s0 = inlined_call_operand.<no memory space> [shape: s32[1], index: 0, kind: input, shape index: {}]
  %s1 = inlined_call_operand.hbm [shape: f32[4,8,128], index: 1, kind: input, shape index: {}]
  %s2 = inlined_call_operand.hbm [shape: f32[4,8,128], index: 2, kind: input, shape index: {}]
  %s3 = inlined_call_operand.hbm [shape: f32[1,1,128], index: 3, kind: output, shape index: {}]
  %s4 = sld [smem:[#allocation0]]
  $region34: #{tpu_custom_call.1} parent=0
    _
  %s6 = ssub.s32 1, %s4
  %s7 = scalar_select 0, %s6, %s4
  %8 = sst [smem:[#allocation3]] %s0
  $region1: #{tpu_custom_call.1} parent=0
    #allocation4 [shape = 'u8[16384]{0}', space=vmem, size = 0x4000, scoped, tag = 'input window, operand 1, single buffered']
    #allocation5 [shape = 's32[1]{0}', space=sflag, size = 0x4, scoped, tag = 'scoped memory for tpu_custom_call.1']
    #allocation6 [shape = 's32[1]{0}', space=sflag, size = 0x4, scoped, tag = 'scoped memory for tpu_custom_call.1']
    #allocation7 [shape = 'u8[16384]{0}', space=vmem, size = 0x4000, scoped, tag = 'input window, operand 2, single buffered']
    #allocation8 [shape = 's32[1]{0}', space=sflag, size = 0x4, scoped, tag = 'scoped memory for tpu_custom_call.1']
    #allocation9 [shape = 'u8[512]{0}', space=vmem, size = 0x400, scoped, tag = 'output window, operand 0, single buffered']
    %9 = vsyncpa [#allocation5], 0
    %10 = vsyncpa [#allocation8], 0
    %11 = vsyncpa [#allocation6], 0
    // Predicated region
    $region2: #{tpu_custom_call.1} parent=1 // pred_check
      _
    $region3: #{tpu_custom_call.1} parent=1 // pred_check_branch
      %13 = sbr.rel (0) target = $region5
    $region4: #{tpu_custom_call.1} parent=1 // pred_region
      %s15 = ssub.s32 512, 512
      %16 = vsyncadd [#allocation5], %s15
      %s17 = sshll.u32 [#allocation4], 4
      %s18 = int_to_ptr.vmem [resolvable:$true] %s17
      %23 = dma.hbm_to_vmem [thread:$0]  %s1, 512, %s18, [#allocation5], 128, 128, 8
    $region5: #{tpu_custom_call.1} parent=1 // pred_fallthru
      _
    // Predicated region
    $region6: #{tpu_custom_call.1} parent=1 // pred_check
      _
    $region7: #{tpu_custom_call.1} parent=1 // pred_check_branch
      %25 = sbr.rel (0) target = $region9
    $region8: #{tpu_custom_call.1} parent=1 // pred_region
      %s27 = ssub.s32 512, 512
      %28 = vsyncadd [#allocation8], %s27
      %s29 = sshll.u32 [#allocation7], 4
      %s30 = int_to_ptr.vmem [resolvable:$true] %s29
      %35 = dma.hbm_to_vmem [thread:$0]  %s2, 512, %s30, [#allocation8], 128, 128, 8
    $region9: #{tpu_custom_call.1} parent=1 // pred_fallthru
      _
    // Predicated region
    $region10: #{tpu_custom_call.1} parent=1 // pred_check
      _
    $region11: #{tpu_custom_call.1} parent=1 // pred_check_branch
      %37 = sbr.rel (0) target = $region13
    $region12: #{tpu_custom_call.1} parent=1 // pred_region
      %38 = dma.done [#allocation5], 512
    $region13: #{tpu_custom_call.1} parent=1 // pred_fallthru
      _
    // Predicated region
    $region14: #{tpu_custom_call.1} parent=1 // pred_check
      _
    $region15: #{tpu_custom_call.1} parent=1 // pred_check_branch
      %40 = sbr.rel (0) target = $region17
    $region16: #{tpu_custom_call.1} parent=1 // pred_region
      %41 = dma.done [#allocation8], 512
    $region17: #{tpu_custom_call.1} parent=1 // pred_fallthru
      _
    %v42 = vld [vmem:[#allocation4] sm:$0xff]
    %s43 = scalar_lea.vmem [#allocation4], 8
    %v44 = vld [vmem:[%s43] sm:$0xff]
    %s45 = scalar_lea.vmem [#allocation4], 16
    %v46 = vld [vmem:[%s45] sm:$0xff]
    %s47 = scalar_lea.vmem [#allocation4], 24
    %v48 = vld [vmem:[%s47] sm:$0xff]
    %v49 = vld [vmem:[#allocation7] sm:$0xff]
    %s50 = scalar_lea.vmem [#allocation7], 8
    %v51 = vld [vmem:[%s50] sm:$0xff]
    %s52 = scalar_lea.vmem [#allocation7], 16
    %v53 = vld [vmem:[%s52] sm:$0xff]
    %s54 = scalar_lea.vmem [#allocation7], 24
    %v55 = vld [vmem:[%s54] sm:$0xff]
    %v56 = vmax.f32 %v42, %v49
    %v57 = vmax.f32 %v44, %v51
    %v58 = vmin.f32 %v46, %v53
    %v59 = vmin.f32 %v48, %v55
    %v60 = vsub.f32 %v58, %v56
    %v61 = vadd.f32 %v60, 1.0
    %v62 = vmax.f32 %v61, 0.0
    %v63 = vsub.f32 %v59, %v57
    %v64 = vadd.f32 %v63, 1.0
    %v65 = vmax.f32 %v64, 0.0
    %v66 = vmul.f32 %v62, %v65
    %v67 = vsub.f32 %v46, %v42
    %v68 = vadd.f32 %v67, 1.0
    %v69 = vsub.f32 %v48, %v44
    %v70 = vadd.f32 %v69, 1.0
    %v71 = vmul.f32 %v68, %v70
    %v72 = vsub.f32 %v53, %v49
    %v73 = vadd.f32 %v72, 1.0
    %v74 = vsub.f32 %v55, %v51
    %v75 = vadd.f32 %v74, 1.0
    %v76 = vmul.f32 %v73, %v75
    %v77 = vadd.f32 %v71, %v76
    %v78 = vsub.f32 %v77, %v66
    %v79 = vrcp.pop %v78
    %v80 = vmul.f32 %v66, %v79
    %v81 = vmax.f32 %v80, 1e-06
    %v82 = vlog2.pop %v81
    %v83 = vmul.f32 %v82, 0.6931472
    %v84 = vsub.f32 0.0, %v83
    %s85 = sld [smem:[#allocation3]]
    %s86 = smul.u32 0, 1024
    %s87 = ssub.s32 %s85, %s86
    %p88 = scmp.ge.s32.totalorder %s87, 1024
    // Predicated region
    $region18: #{tpu_custom_call.1} parent=1 // pred_check
      %p89 = pneg %p88
    $region19: #{tpu_custom_call.1} parent=1 // pred_check_branch
      %91 = sbr.rel (%p89) target = $region21
    $region20: #{tpu_custom_call.1} parent=1 // pred_region
      %v92 = vrot.slane %v84, 4
      %v93 = vadd.f32 %v84, %v92
      %v94 = vrot.slane %v93, 2
      %v95 = vadd.f32 %v93, %v94
      %v96 = vrot.slane %v95, 1
      %v97 = vadd.f32 %v95, %v96
      %98 = vst [vmem:[#allocation9] sm:$0x1] %v97
    $region21: #{tpu_custom_call.1} parent=1 // pred_fallthru
      _
    %p99 = scmp.lt.s32.totalorder %s87, 1024
    // Predicated region
    $region22: #{tpu_custom_call.1} parent=1 // pred_check
      %p100 = pneg %p99
    $region23: #{tpu_custom_call.1} parent=1 // pred_check_branch
      %102 = sbr.rel (%p100) target = $region25
    $region24: #{tpu_custom_call.1} parent=1 // pred_region
      %v103 = vlaneseq
      %v104 = vshrl.u32 %v103, 7
      %v105 = vlaneseq
      %v106 = vand.u32 %v105, 127
      %v107 = vmul.u32 %v104, 128
      %v108 = vadd.s32 %v107, %v106
      %v109 = vstv %s87
      %vm110 = vcmp.lt.s32.totalorder %v108, %v109
      %v111 = vsel %vm110, %v84, 0.0
      %v112 = vrot.slane %v111, 4
      %v113 = vadd.f32 %v111, %v112
      %v114 = vrot.slane %v113, 2
      %v115 = vadd.f32 %v113, %v114
      %v116 = vrot.slane %v115, 1
      %v117 = vadd.f32 %v115, %v116
      %118 = vst [vmem:[#allocation9] sm:$0x1] %v117
    $region25: #{tpu_custom_call.1} parent=1 // pred_fallthru
      _
    // Predicated region
    $region26: #{tpu_custom_call.1} parent=1 // pred_check
      _
    $region27: #{tpu_custom_call.1} parent=1 // pred_check_branch
      %120 = sbr.rel (0) target = $region29
    $region28: #{tpu_custom_call.1} parent=1 // pred_region
      %s122 = ssub.s32 16, 16
      %123 = vsyncadd [#allocation6], %s122
      %s125 = sshll.u32 [#allocation9], 4
      %s126 = int_to_ptr.vmem [resolvable:$true] %s125
      %128 = dma.vmem_to_hbm [thread:$0]  %s126, 16, %s3, [#allocation6]
    $region29: #{tpu_custom_call.1} parent=1 // pred_fallthru
      _
    // Predicated region
    $region30: #{tpu_custom_call.1} parent=1 // pred_check
      _
    $region31: #{tpu_custom_call.1} parent=1 // pred_check_branch
      %130 = sbr.rel (0) target = $region33
    $region32: #{tpu_custom_call.1} parent=1 // pred_region
      %131 = dma.done [#allocation6], 16
    $region33: #{tpu_custom_call.1} parent=1 // pred_fallthru
      _
    %132 = vsyncpa [#allocation5], 1
    %133 = vsyncpa [#allocation8], 1
    %134 = vsyncpa [#allocation6], 1

</llo_original>
